<compile_context>
chip_gen: v6e
topology: v6e:2x2x1
jax: 0.10.0
libtpu: 0.0.40
codegen_flags: <defaults>
</compile_context>

<pallas_src>
import functools

import jax
import jax.numpy as jnp
from jax import lax
from jax.experimental import pallas as pl
from jax.experimental.pallas import tpu as pltpu


def _gelu(v, approximate):
    if approximate:
        # tanh form: transcendental lowers to the EUP (its own VLIW slot); the
        # surrounding polynomial stays in v.dtype (bf16 on v6e/v7x -> packed VALU).
        return 0.5 * v * (1.0 + jnp.tanh(0.7978845608028654 * (v + 0.044715 * (v * v * v))))
    # Exact erf-based GELU (== torch.nn.GELU() default), evaluated in f32.
    v32 = v.astype(jnp.float32)
    return (0.5 * v32 * (1.0 + lax.erf(v32 * 0.7071067811865476))).astype(v.dtype)


def simple_nn_kernel(x_ref,
                     w1_ref, b1_ref,
                     w2_ref, b2_ref,
                     w3_ref, b3_ref,
                     w4_ref, b4_ref,
                     o_ref,
                     *, approximate_gelu, elementwise_dtype):
    # x tile arrives untransposed and uncast ([tile, in], input dtype): cast on
    # the VPU, contract with a transposed-rhs matmul (w1 @ x_blk^T) so the
    # orientation flip happens in VMEM, not as a wrapper-level HBM pass.
    x_blk = x_ref[...].astype(w1_ref.dtype)                              # (tile, in)

    # fc1 -> GELU -> (dropout = identity in eval mode)
    h = lax.dot_general(w1_ref[...], x_blk,
                        dimension_numbers=(((1,), (1,)), ((), ())),
                        preferred_element_type=jnp.float32) + b1_ref[...]   # (hidden, tile) f32
    h = _gelu(h.astype(elementwise_dtype), approximate_gelu)

    # fc2 -> GELU -> (dropout) -> +residual
    h2 = jnp.dot(w2_ref[...], h.astype(w2_ref.dtype),
                 preferred_element_type=jnp.float32) + b2_ref[...]
    h = _gelu(h2.astype(elementwise_dtype), approximate_gelu) + h

    # fc3 -> GELU -> (dropout) -> +residual
    h3 = jnp.dot(w3_ref[...], h.astype(w3_ref.dtype),
                 preferred_element_type=jnp.float32) + b3_ref[...]
    h = _gelu(h3.astype(elementwise_dtype), approximate_gelu) + h

    # fc4 -> sigmoid : b4 is a scalar in SMEM, (1, tile) store is lane-dense.
    out = jnp.dot(w4_ref[...], h.astype(w4_ref.dtype),
                  preferred_element_type=jnp.float32) + b4_ref[0, 0]
    o_ref[...] = jax.nn.sigmoid(out).astype(o_ref.dtype)


def _round_up(v, m):
    return ((v + m - 1) // m) * m


def _backend_defaults():
    """Best-effort (pre_v6?, scoped-VMEM ceiling bytes) with safe fallbacks."""
    try:
        kind = jax.devices()[0].device_kind.lower()
    except Exception:
        kind = ""
    pre_v6 = any(tag in kind for tag in ("v2", "v3", "v4", "v5"))
    try:
        vmem_cap = int(pltpu.get_tpu_info().vmem_capacity_bytes)
    except Exception:
        vmem_cap = 64 << 20                       # assume the smallest (v7x) if unknown
    # ~32 MiB ceiling on 64 MiB parts (v7x), up to ~96 MiB on 128 MiB parts (v5e/v6e).
    ceiling = max(16 << 20, min(96 << 20, vmem_cap - (32 << 20)))
    return pre_v6, ceiling


@functools.partial(jax.jit, static_argnames=("tile_b", "approximate_gelu",
                                              "matmul_dtype", "elementwise_dtype"))
def simple_nn_forward(x, params, *, tile_b=8192, approximate_gelu=True,
                      matmul_dtype=jnp.bfloat16, elementwise_dtype=None):
    """x: [batch, in_features]; params in PyTorch layout (W: [out, in], b: [out, 1])."""
    w1, b1, w2, b2, w3, b3, w4, b4 = params
    batch, in_features = x.shape
    hidden = w1.shape[0]

    pre_v6, vmem_ceiling = _backend_defaults()
    if elementwise_dtype is None:
        # bf16 elementwise halves VALU work / vreg pressure on v6e/v7x; keep f32
        # on v5e (no bf16 VALU/EUP) and on the f32-matmul check path.
        use_bf16_ew = (jnp.dtype(matmul_dtype) == jnp.dtype(jnp.bfloat16)) and not pre_v6
        elementwise_dtype = jnp.bfloat16 if use_bf16_ew else jnp.float32

    # ---- batch tile --------------------------------------------------------
    # Big 128-aligned tiles amortize the ~0.35 us per-grid-step overhead; cap at
    # round_up(batch/2, 128) so the grid has >= 2 steps whenever possible
    # ("parallel" axis -> both TensorCores busy on v7x).
    lane = 128
    tile_cap = max(lane, (int(tile_b) // lane) * lane)
    tile = min(tile_cap, max(lane, _round_up(pl.cdiv(batch, 2), lane)))

    mm_b = jnp.dtype(matmul_dtype).itemsize
    ew_b = jnp.dtype(elementwise_dtype).itemsize
    x_b = x.dtype.itemsize
    weight_bytes = (hidden * in_features + 2 * hidden * hidden + hidden) * mm_b
    bias_bytes = 3 * hidden * 4 + 4

    def vmem_estimate(t):
        io = 2 * t * in_features * x_b + 2 * t * 4                      # double-buffered x / out tiles
        live = (t * in_features * (x_b + mm_b)                          # x tile + cast copy
                + t * hidden * (4 + 3 * ew_b + mm_b))                   # f32 acc + gelu/residual temps
        return 2 * weight_bytes + 2 * bias_bytes + io + live

    while tile > lane and int(vmem_estimate(tile) * 1.5) > vmem_ceiling:
        tile = max(lane, ((tile // 2) // lane) * lane)
    vmem_limit = int(min(max(vmem_estimate(tile) * 1.5, 16 << 20), vmem_ceiling))

    # ---- operand prep (no HBM-level pad/cast/transpose of x) ---------------
    # x stays [batch, in] in its own dtype; the kernel casts/contracts each VMEM
    # tile.  Only a batch smaller than one tile is zero-padded (so the single
    # block exactly covers the array); larger ragged batches use Pallas' masked
    # partial last block.
    if batch < tile:
        x_in = jnp.pad(x, ((0, tile - batch), (0, 0)))
        rows = tile
    else:
        x_in = x
        rows = batch
    grid = (pl.cdiv(rows, tile),)

    w1c, w2c, w3c, w4c = (w.astype(matmul_dtype) for w in (w1, w2, w3, w4))
    b1c, b2c, b3c = (b.astype(jnp.float32) for b in (b1, b2, b3))
    b4c = b4.astype(jnp.float32).reshape(1, 1)                          # scalar -> SMEM

    full = lambda a: pl.BlockSpec(a.shape, lambda i: (0,) * a.ndim)

    cost = pl.CostEstimate(
        flops=int(2 * rows * (in_features * hidden + 2 * hidden * hidden + hidden)
                  + 10 * rows * (3 * hidden + 1)),
        transcendentals=int(rows * (3 * hidden + 1)),
        bytes_accessed=int(rows * (in_features * x_b + 4) + weight_bytes + bias_bytes),
    )

    out = pl.pallas_call(
        functools.partial(simple_nn_kernel,
                          approximate_gelu=approximate_gelu,
                          elementwise_dtype=elementwise_dtype),
        out_shape=jax.ShapeDtypeStruct((1, rows), x.dtype),
        grid_spec=pltpu.PrefetchScalarGridSpec(
            num_scalar_prefetch=0,
            grid=grid,
            in_specs=[
                pl.BlockSpec((tile, in_features), lambda i: (i, 0)),    # x tile (untransposed)
                full(w1c), full(b1c),
                full(w2c), full(b2c),
                full(w3c), full(b3c),
                full(w4c),
                pl.BlockSpec(memory_space=pltpu.MemorySpace.SMEM),      # b4 scalar
            ],
            out_specs=pl.BlockSpec((1, tile), lambda i: (0, i)),
        ),
        compiler_params=pltpu.CompilerParams(
            # No-op on single-TC v5e/v6e; shards batch tiles across both TCs on v7x.
            dimension_semantics=("parallel",),
            vmem_limit_bytes=vmem_limit,
        ),
        cost_estimate=cost,
    )(x_in, w1c, b1c, w2c, b2c, w3c, b3c, w4c, b4c)

    return out[:, :batch].T                                             # (batch, 1)


def init_params(key, input_size, hidden_size, dtype=jnp.float32):
    """PyTorch-layout params: W [out_features, in_features], b [out_features, 1]."""
    ks = jax.random.split(key, 8)

    def lin(kw, kb, fan_in, fan_out):
        bound = 1.0 / (fan_in ** 0.5)
        w = jax.random.uniform(kw, (fan_out, fan_in), dtype, -bound, bound)
        b = jax.random.uniform(kb, (fan_out, 1), dtype, -bound, bound)
        return w, b

    w1, b1 = lin(ks[0], ks[1], input_size, hidden_size)
    w2, b2 = lin(ks[2], ks[3], hidden_size, hidden_size)
    w3, b3 = lin(ks[4], ks[5], hidden_size, hidden_size)
    w4, b4 = lin(ks[6], ks[7], hidden_size, 1)
    return (w1, b1, w2, b2, w3, b3, w4, b4)


def reference_forward(x, params):
    w1, b1, w2, b2, w3, b3, w4, b4 = params
    gelu = lambda v: 0.5 * v * (1.0 + lax.erf(v / jnp.sqrt(2.0)))
    h = gelu(x @ w1.T + b1.T)
    h = gelu(h @ w2.T + b2.T) + h
    h = gelu(h @ w3.T + b3.T) + h
    return jax.nn.sigmoid(h @ w4.T + b4.T)


if __name__ == "__main__":
    key = jax.random.PRNGKey(0)
    k_x, k_p, k_x2 = jax.random.split(key, 3)

    batch, input_size, hidden_size = 10, 16, 32
    x = jax.random.normal(k_x, (batch, input_size), jnp.float32)
    params = init_params(k_p, input_size, hidden_size)
    ref = reference_forward(x, params)

    # Production path: bf16 MXU operands, tanh-GELU (EUP), bf16 elementwise on
    # v6e/v7x (f32 on v5e), f32 accumulation.
    out = jax.block_until_ready(simple_nn_forward(x, params))
    assert out.shape == (batch, 1), out.shape
    assert jnp.allclose(out, ref, atol=3e-2, rtol=3e-2), "bf16 path mismatch vs reference"

    # Exact-semantics check path (f32 matmuls, f32 elementwise, erf GELU).
    out_f32 = jax.block_until_ready(simple_nn_forward(
        x, params, matmul_dtype=jnp.float32, elementwise_dtype=jnp.float32,
        approximate_gelu=False))
    assert jnp.allclose(out_f32, ref, atol=1e-5, rtol=1e-5), "f32 path mismatch vs reference"

    # Multi-tile path with a ragged (partial) last block: grid >= 2 steps.
    batch2 = 300
    x2 = jax.random.normal(k_x2, (batch2, input_size), jnp.float32)
    ref2 = reference_forward(x2, params)
    out2 = jax.block_until_ready(simple_nn_forward(x2, params, tile_b=128))
    assert out2.shape == (batch2, 1), out2.shape
    assert jnp.allclose(out2, ref2, atol=3e-2, rtol=3e-2), "ragged multi-tile path mismatch"

    print("KERNEL_OK")
</pallas_src>

<mosaic_0001>
module attributes {stable_mosaic.version = 11 : i64} {
  func.func @simple_nn_kernel(%arg0: i32, %arg1: memref<128x16xf32, #tpu.memory_space<vmem>>, %arg2: memref<32x16xbf16, #tpu.memory_space<vmem>>, %arg3: memref<32x1xf32, #tpu.memory_space<vmem>>, %arg4: memref<32x32xbf16, #tpu.memory_space<vmem>>, %arg5: memref<32x1xf32, #tpu.memory_space<vmem>>, %arg6: memref<32x32xbf16, #tpu.memory_space<vmem>>, %arg7: memref<32x1xf32, #tpu.memory_space<vmem>>, %arg8: memref<1x32xbf16, #tpu.memory_space<vmem>>, %arg9: memref<1x1xf32, #tpu.memory_space<smem>>, %arg10: memref<1x128xf32, #tpu.memory_space<vmem>>) attributes {dimension_semantics = [#tpu.dimension_semantics<parallel>], iteration_bounds = array<i64: 1>, scalar_prefetch = 0 : i64, scratch_operands = 0 : i64, tpu.core_type = #tpu.core_type<tc>, window_params = [{transform_indices = @transform_0, window_bounds = array<i64: 128, 16>}, {pipeline_mode = #tpu.pipeline_mode<synchronous>, transform_indices = @transform_1, window_bounds = array<i64: 32, 16>}, {pipeline_mode = #tpu.pipeline_mode<synchronous>, transform_indices = @transform_2, window_bounds = array<i64: 32, 1>}, {pipeline_mode = #tpu.pipeline_mode<synchronous>, transform_indices = @transform_3, window_bounds = array<i64: 32, 32>}, {pipeline_mode = #tpu.pipeline_mode<synchronous>, transform_indices = @transform_4, window_bounds = array<i64: 32, 1>}, {pipeline_mode = #tpu.pipeline_mode<synchronous>, transform_indices = @transform_5, window_bounds = array<i64: 32, 32>}, {pipeline_mode = #tpu.pipeline_mode<synchronous>, transform_indices = @transform_6, window_bounds = array<i64: 32, 1>}, {pipeline_mode = #tpu.pipeline_mode<synchronous>, transform_indices = @transform_7, window_bounds = array<i64: 1, 32>}, {transform_indices = @transform_8, window_bounds = array<i64: 1, 1>}, {transform_indices = @transform_9, window_bounds = array<i64: 1, 128>}]} {
    %c0 = arith.constant 0 : index
    %c0_0 = arith.constant 0 : index
    %0 = vector.load %arg1[%c0, %c0_0] : memref<128x16xf32, #tpu.memory_space<vmem>>, vector<128x16xf32>
    %1 = arith.truncf %0 : vector<128x16xf32> to vector<128x16xbf16>
    %c0_1 = arith.constant 0 : index
    %c0_2 = arith.constant 0 : index
    %2 = vector.load %arg2[%c0_1, %c0_2] : memref<32x16xbf16, #tpu.memory_space<vmem>>, vector<32x16xbf16>
    %cst = arith.constant dense<0.000000e+00> : vector<32x128xf32>
    %3 = tpu.matmul %2, %1, %cst {dimension_numbers = #tpu.dot_dimension_numbers<[1], [1], [0], [0], [0, 0, 1, 0], [], []>} : vector<32x16xbf16>, vector<128x16xbf16>, vector<32x128xf32> -> vector<32x128xf32>
    %c0_3 = arith.constant 0 : index
    %c0_4 = arith.constant 0 : index
    %4 = vector.load %arg3[%c0_3, %c0_4] : memref<32x1xf32, #tpu.memory_space<vmem>>, vector<32x1xf32>
    %5 = vector.broadcast %4 : vector<32x1xf32> to vector<32x128xf32>
    %6 = arith.addf %3, %5 : vector<32x128xf32>
    %7 = arith.truncf %6 : vector<32x128xf32> to vector<32x128xbf16>
    %cst_5 = arith.constant 5.000000e-01 : bf16
    %8 = vector.broadcast %cst_5 : bf16 to vector<32x128xbf16>
    %9 = arith.mulf %8, %7 : vector<32x128xbf16>
    %10 = arith.mulf %7, %7 : vector<32x128xbf16>
    %11 = arith.mulf %10, %7 : vector<32x128xbf16>
    %cst_6 = arith.constant 4.467770e-02 : bf16
    %12 = vector.broadcast %cst_6 : bf16 to vector<32x128xbf16>
    %13 = arith.mulf %12, %11 : vector<32x128xbf16>
    %14 = arith.addf %7, %13 : vector<32x128xbf16>
    %cst_7 = arith.constant 7.968750e-01 : bf16
    %15 = vector.broadcast %cst_7 : bf16 to vector<32x128xbf16>
    %16 = arith.mulf %15, %14 : vector<32x128xbf16>
    %17 = math.tanh %16 : vector<32x128xbf16>
    %cst_8 = arith.constant 1.000000e+00 : bf16
    %18 = vector.broadcast %cst_8 : bf16 to vector<32x128xbf16>
    %19 = arith.addf %18, %17 : vector<32x128xbf16>
    %20 = arith.mulf %9, %19 : vector<32x128xbf16>
    %c0_9 = arith.constant 0 : index
    %c0_10 = arith.constant 0 : index
    %21 = vector.load %arg4[%c0_9, %c0_10] : memref<32x32xbf16, #tpu.memory_space<vmem>>, vector<32x32xbf16>
    %cst_11 = arith.constant dense<0.000000e+00> : vector<32x128xf32>
    %22 = tpu.matmul %21, %20, %cst_11 {dimension_numbers = #tpu.dot_dimension_numbers<[1], [0], [0], [1], [0, 0, 1, 1], [], []>} : vector<32x32xbf16>, vector<32x128xbf16>, vector<32x128xf32> -> vector<32x128xf32>
    %c0_12 = arith.constant 0 : index
    %c0_13 = arith.constant 0 : index
    %23 = vector.load %arg5[%c0_12, %c0_13] : memref<32x1xf32, #tpu.memory_space<vmem>>, vector<32x1xf32>
    %24 = vector.broadcast %23 : vector<32x1xf32> to vector<32x128xf32>
    %25 = arith.addf %22, %24 : vector<32x128xf32>
    %26 = arith.truncf %25 : vector<32x128xf32> to vector<32x128xbf16>
    %cst_14 = arith.constant 5.000000e-01 : bf16
    %27 = vector.broadcast %cst_14 : bf16 to vector<32x128xbf16>
    %28 = arith.mulf %27, %26 : vector<32x128xbf16>
    %29 = arith.mulf %26, %26 : vector<32x128xbf16>
    %30 = arith.mulf %29, %26 : vector<32x128xbf16>
    %cst_15 = arith.constant 4.467770e-02 : bf16
    %31 = vector.broadcast %cst_15 : bf16 to vector<32x128xbf16>
    %32 = arith.mulf %31, %30 : vector<32x128xbf16>
    %33 = arith.addf %26, %32 : vector<32x128xbf16>
    %cst_16 = arith.constant 7.968750e-01 : bf16
    %34 = vector.broadcast %cst_16 : bf16 to vector<32x128xbf16>
    %35 = arith.mulf %34, %33 : vector<32x128xbf16>
    %36 = math.tanh %35 : vector<32x128xbf16>
    %cst_17 = arith.constant 1.000000e+00 : bf16
    %37 = vector.broadcast %cst_17 : bf16 to vector<32x128xbf16>
    %38 = arith.addf %37, %36 : vector<32x128xbf16>
    %39 = arith.mulf %28, %38 : vector<32x128xbf16>
    %40 = arith.addf %39, %20 : vector<32x128xbf16>
    %c0_18 = arith.constant 0 : index
    %c0_19 = arith.constant 0 : index
    %41 = vector.load %arg6[%c0_18, %c0_19] : memref<32x32xbf16, #tpu.memory_space<vmem>>, vector<32x32xbf16>
    %cst_20 = arith.constant dense<0.000000e+00> : vector<32x128xf32>
    %42 = tpu.matmul %41, %40, %cst_20 {dimension_numbers = #tpu.dot_dimension_numbers<[1], [0], [0], [1], [0, 0, 1, 1], [], []>} : vector<32x32xbf16>, vector<32x128xbf16>, vector<32x128xf32> -> vector<32x128xf32>
    %c0_21 = arith.constant 0 : index
    %c0_22 = arith.constant 0 : index
    %43 = vector.load %arg7[%c0_21, %c0_22] : memref<32x1xf32, #tpu.memory_space<vmem>>, vector<32x1xf32>
    %44 = vector.broadcast %43 : vector<32x1xf32> to vector<32x128xf32>
    %45 = arith.addf %42, %44 : vector<32x128xf32>
    %46 = arith.truncf %45 : vector<32x128xf32> to vector<32x128xbf16>
    %cst_23 = arith.constant 5.000000e-01 : bf16
    %47 = vector.broadcast %cst_23 : bf16 to vector<32x128xbf16>
    %48 = arith.mulf %47, %46 : vector<32x128xbf16>
    %49 = arith.mulf %46, %46 : vector<32x128xbf16>
    %50 = arith.mulf %49, %46 : vector<32x128xbf16>
    %cst_24 = arith.constant 4.467770e-02 : bf16
    %51 = vector.broadcast %cst_24 : bf16 to vector<32x128xbf16>
    %52 = arith.mulf %51, %50 : vector<32x128xbf16>
    %53 = arith.addf %46, %52 : vector<32x128xbf16>
    %cst_25 = arith.constant 7.968750e-01 : bf16
    %54 = vector.broadcast %cst_25 : bf16 to vector<32x128xbf16>
    %55 = arith.mulf %54, %53 : vector<32x128xbf16>
    %56 = math.tanh %55 : vector<32x128xbf16>
    %cst_26 = arith.constant 1.000000e+00 : bf16
    %57 = vector.broadcast %cst_26 : bf16 to vector<32x128xbf16>
    %58 = arith.addf %57, %56 : vector<32x128xbf16>
    %59 = arith.mulf %48, %58 : vector<32x128xbf16>
    %60 = arith.addf %59, %40 : vector<32x128xbf16>
    %c0_27 = arith.constant 0 : index
    %c0_28 = arith.constant 0 : index
    %61 = vector.load %arg8[%c0_27, %c0_28] : memref<1x32xbf16, #tpu.memory_space<vmem>>, vector<1x32xbf16>
    %cst_29 = arith.constant dense<0.000000e+00> : vector<1x128xf32>
    %62 = tpu.matmul %61, %60, %cst_29 {dimension_numbers = #tpu.dot_dimension_numbers<[1], [0], [0], [1], [0, 0, 1, 1], [], []>} : vector<1x32xbf16>, vector<32x128xbf16>, vector<1x128xf32> -> vector<1x128xf32>
    %c0_30 = arith.constant 0 : index
    %c0_31 = arith.constant 0 : index
    %63 = memref.load %arg9[%c0_30, %c0_31] : memref<1x1xf32, #tpu.memory_space<smem>>
    %64 = vector.broadcast %63 : f32 to vector<1x128xf32>
    %65 = arith.addf %62, %64 : vector<1x128xf32>
    %66 = arith.negf %65 : vector<1x128xf32>
    %67 = math.exp %66 : vector<1x128xf32>
    %cst_32 = arith.constant 1.000000e+00 : f32
    %68 = vector.broadcast %cst_32 : f32 to vector<1x128xf32>
    %69 = arith.addf %68, %67 : vector<1x128xf32>
    %70 = arith.divf %68, %69 : vector<1x128xf32>
    %c0_33 = arith.constant 0 : index
    %c0_34 = arith.constant 0 : index
    %71 = vector.load %arg10[%c0_33, %c0_34] : memref<1x128xf32, #tpu.memory_space<vmem>>, vector<1x128xf32>
    tpu.vector_store %arg10[%c0_33, %c0_34], %70 {strides = array<i32>} : memref<1x128xf32, #tpu.memory_space<vmem>>, vector<1x128xf32>,
    return
  }
  func.func @transform_0(%arg0: i32) -> (i32, i32) {
    %c0_i32 = arith.constant 0 : i32
    %c0_i32_0 = arith.constant 0 : i32
    return %arg0, %c0_i32 : i32, i32
  }
  func.func @transform_1(%arg0: i32) -> (i32, i32) {
    %c0_i32 = arith.constant 0 : i32
    %c0_i32_0 = arith.constant 0 : i32
    %c0_i32_1 = arith.constant 0 : i32
    return %c0_i32, %c0_i32_0 : i32, i32
  }
  func.func @transform_2(%arg0: i32) -> (i32, i32) {
    %c0_i32 = arith.constant 0 : i32
    %c0_i32_0 = arith.constant 0 : i32
    %c0_i32_1 = arith.constant 0 : i32
    return %c0_i32, %c0_i32_0 : i32, i32
  }
  func.func @transform_3(%arg0: i32) -> (i32, i32) {
    %c0_i32 = arith.constant 0 : i32
    %c0_i32_0 = arith.constant 0 : i32
    %c0_i32_1 = arith.constant 0 : i32
    return %c0_i32, %c0_i32_0 : i32, i32
  }
  func.func @transform_4(%arg0: i32) -> (i32, i32) {
    %c0_i32 = arith.constant 0 : i32
    %c0_i32_0 = arith.constant 0 : i32
    %c0_i32_1 = arith.constant 0 : i32
    return %c0_i32, %c0_i32_0 : i32, i32
  }
  func.func @transform_5(%arg0: i32) -> (i32, i32) {
    %c0_i32 = arith.constant 0 : i32
    %c0_i32_0 = arith.constant 0 : i32
    %c0_i32_1 = arith.constant 0 : i32
    return %c0_i32, %c0_i32_0 : i32, i32
  }
  func.func @transform_6(%arg0: i32) -> (i32, i32) {
    %c0_i32 = arith.constant 0 : i32
    %c0_i32_0 = arith.constant 0 : i32
    %c0_i32_1 = arith.constant 0 : i32
    return %c0_i32, %c0_i32_0 : i32, i32
  }
  func.func @transform_7(%arg0: i32) -> (i32, i32) {
    %c0_i32 = arith.constant 0 : i32
    %c0_i32_0 = arith.constant 0 : i32
    %c0_i32_1 = arith.constant 0 : i32
    return %c0_i32, %c0_i32_0 : i32, i32
  }
  func.func @transform_8(%arg0: i32) -> (i32, i32) {
    %c0_i32 = arith.constant 0 : i32
    %c0_i32_0 = arith.constant 0 : i32
    %c0_i32_1 = arith.constant 0 : i32
    return %c0_i32, %c0_i32_0 : i32, i32
  }
  func.func @transform_9(%arg0: i32) -> (i32, i32) {
    %c0_i32 = arith.constant 0 : i32
    %c0_i32_0 = arith.constant 0 : i32
    return %c0_i32, %arg0 : i32, i32
  }
}

</mosaic_0001>

<llo_original>
// kernel: simple_nn_forward.1
$region0: #{simple_nn_forward.1}
  #allocation0 [shape = 'u32[]', space=smem, size = 0x4, offset = 0x4, fixed_abs, tag = 'smem constant byte address 0x4 - core index']
  #allocation1 [shape = 'u32[144,128]{1,0:T(1,128)}', space=vmem, size = 0x12000, scoped, tag = 'internal scratch']
  #allocation2 [shape = 'f32[1,1]{1,0:T(1,128)S(6)}', space=smem, size = 0x200, scoped, tag = 'scoped memory for simple_nn_forward.1']
  %s0 = inlined_call_operand.vmem [shape: f32[128,16], index: 0, kind: input, shape index: {}]
  %s1 = inlined_call_operand.vmem [shape: bf16[32,16], index: 1, kind: input, shape index: {}]
  %s2 = inlined_call_operand.vmem [shape: f32[32,1], index: 2, kind: input, shape index: {}]
  %s3 = inlined_call_operand.vmem [shape: bf16[32,32], index: 3, kind: input, shape index: {}]
  %s4 = inlined_call_operand.vmem [shape: f32[32,1], index: 4, kind: input, shape index: {}]
  %s5 = inlined_call_operand.vmem [shape: bf16[32,32], index: 5, kind: input, shape index: {}]
  %s6 = inlined_call_operand.vmem [shape: f32[32,1], index: 6, kind: input, shape index: {}]
  %s7 = inlined_call_operand.vmem [shape: bf16[1,32], index: 7, kind: input, shape index: {}]
  %s8 = inlined_call_operand.<no memory space> [shape: f32[1,1], index: 8, kind: input, shape index: {}]
  %s9 = inlined_call_operand.vmem [shape: f32[1,128], index: 9, kind: output, shape index: {}]
  %s10 = sld [smem:[#allocation0]]
  $region46: #{simple_nn_forward.1} parent=0
    _
  %s12 = ssub.s32 1, %s10
  %s13 = scalar_select 0, %s12, %s10
  %14 = sst [smem:[#allocation2]] %s8
  // Predicated region
  $region2: #{simple_nn_forward.1} parent=0 // pred_check
    _
  $region3: #{simple_nn_forward.1} parent=0 // pred_check_branch
    %16 = sbr.rel (0) target = $region5
  $region4: #{simple_nn_forward.1} parent=0 // pred_region
    _
  $region5: #{simple_nn_forward.1} parent=0 // pred_fallthru
    _
  // Predicated region
  $region6: #{simple_nn_forward.1} parent=0 // pred_check
    _
  $region7: #{simple_nn_forward.1} parent=0 // pred_check_branch
    %18 = sbr.rel (0) target = $region9
  $region8: #{simple_nn_forward.1} parent=0 // pred_region
    _
  $region9: #{simple_nn_forward.1} parent=0 // pred_fallthru
    _
  // Predicated region
  $region10: #{simple_nn_forward.1} parent=0 // pred_check
    _
  $region11: #{simple_nn_forward.1} parent=0 // pred_check_branch
    %20 = sbr.rel (0) target = $region13
  $region12: #{simple_nn_forward.1} parent=0 // pred_region
    _
  $region13: #{simple_nn_forward.1} parent=0 // pred_fallthru
    _
  // Predicated region
  $region14: #{simple_nn_forward.1} parent=0 // pred_check
    _
  $region15: #{simple_nn_forward.1} parent=0 // pred_check_branch
    %22 = sbr.rel (0) target = $region17
  $region16: #{simple_nn_forward.1} parent=0 // pred_region
    _
  $region17: #{simple_nn_forward.1} parent=0 // pred_fallthru
    _
  // Predicated region
  $region18: #{simple_nn_forward.1} parent=0 // pred_check
    _
  $region19: #{simple_nn_forward.1} parent=0 // pred_check_branch
    %24 = sbr.rel (0) target = $region21
  $region20: #{simple_nn_forward.1} parent=0 // pred_region
    _
  $region21: #{simple_nn_forward.1} parent=0 // pred_fallthru
    _
  // Predicated region
  $region22: #{simple_nn_forward.1} parent=0 // pred_check
    _
  $region23: #{simple_nn_forward.1} parent=0 // pred_check_branch
    %26 = sbr.rel (0) target = $region25
  $region24: #{simple_nn_forward.1} parent=0 // pred_region
    _
  $region25: #{simple_nn_forward.1} parent=0 // pred_fallthru
    _
  // Predicated region
  $region26: #{simple_nn_forward.1} parent=0 // pred_check
    _
  $region27: #{simple_nn_forward.1} parent=0 // pred_check_branch
    %28 = sbr.rel (0) target = $region29
  $region28: #{simple_nn_forward.1} parent=0 // pred_region
    _
  $region29: #{simple_nn_forward.1} parent=0 // pred_fallthru
    _
  // Predicated region
  $region30: #{simple_nn_forward.1} parent=0 // pred_check
    _
  $region31: #{simple_nn_forward.1} parent=0 // pred_check_branch
    %30 = sbr.rel (0) target = $region33
  $region32: #{simple_nn_forward.1} parent=0 // pred_region
    _
  $region33: #{simple_nn_forward.1} parent=0 // pred_fallthru
    _
  // Predicated region
  $region34: #{simple_nn_forward.1} parent=0 // pred_check
    _
  $region35: #{simple_nn_forward.1} parent=0 // pred_check_branch
    %32 = sbr.rel (0) target = $region37
  $region36: #{simple_nn_forward.1} parent=0 // pred_region
    _
  $region37: #{simple_nn_forward.1} parent=0 // pred_fallthru
    _
  %v38 = vld [vmem:[%s0] sm:$0xff]
  %v39 = vld [vmem:[%s0 + $0x8] sm:$0xff]
  %v40 = vld [vmem:[%s0 + $0x10] sm:$0xff]
  %v41 = vld [vmem:[%s0 + $0x18] sm:$0xff]
  %v42 = vld [vmem:[%s0 + $0x20] sm:$0xff]
  %v43 = vld [vmem:[%s0 + $0x28] sm:$0xff]
  %v44 = vld [vmem:[%s0 + $0x30] sm:$0xff]
  %v45 = vld [vmem:[%s0 + $0x38] sm:$0xff]
  %v46 = vld [vmem:[%s0 + $0x40] sm:$0xff]
  %v47 = vld [vmem:[%s0 + $0x48] sm:$0xff]
  %v48 = vld [vmem:[%s0 + $0x50] sm:$0xff]
  %v49 = vld [vmem:[%s0 + $0x58] sm:$0xff]
  %v50 = vld [vmem:[%s0 + $0x60] sm:$0xff]
  %v51 = vld [vmem:[%s0 + $0x68] sm:$0xff]
  %v52 = vld [vmem:[%s0 + $0x70] sm:$0xff]
  %v53 = vld [vmem:[%s0 + $0x78] sm:$0xff]
  %v54 = vpack.c.bf16 %v39, %v38
  %v55 = vpack.c.bf16 %v41, %v40
  %v56 = vpack.c.bf16 %v43, %v42
  %v57 = vpack.c.bf16 %v45, %v44
  %v58 = vpack.c.bf16 %v47, %v46
  %v59 = vpack.c.bf16 %v49, %v48
  %v60 = vpack.c.bf16 %v51, %v50
  %v61 = vpack.c.bf16 %v53, %v52
  %v62 = vld [vmem:[%s1] sm:$0xf]
  %v63 = vld [vmem:[%s1 + $0x4] sm:$0xf]
  %v64 = vld [vmem:[%s1 + $0x8] sm:$0xf]
  %v65 = vld [vmem:[%s1 + $0xc] sm:$0xf]
  %v66 = vld [vmem:[%s2] sm:$0xff]
  %v67 = vld [vmem:[%s2 + $0x8] sm:$0xff]
  %v68 = vld [vmem:[%s2 + $0x10] sm:$0xff]
  %v69 = vld [vmem:[%s2 + $0x18] sm:$0xff]
  %71 = vset.pattern.permute.xlu0 0
  %72 = vperm.xlu0 %71, %v66
  %v73 = vpop.permute.xlu0 %72
  %76 = vset.pattern.permute.xlu0 0
  %77 = vperm.xlu0 %76, %v67
  %v78 = vpop.permute.xlu0 %77
  %81 = vset.pattern.permute.xlu0 0
  %82 = vperm.xlu0 %81, %v68
  %v83 = vpop.permute.xlu0 %82
  %86 = vset.pattern.permute.xlu0 0
  %87 = vperm.xlu0 %86, %v69
  %v88 = vpop.permute.xlu0 %87
  %v94 = vunpack.c.l.b16 %v62
  %v95 = vunpack.c.l.b16 %v63
  %v96 = vunpack.c.l.b16 %v64
  %v97 = vunpack.c.l.b16 %v65
  %v98 = vpack.c.b16 %v95, %v94
  %v99 = vpack.c.b16 %v97, %v96
  %vm100 = vcmask 130048
  %v102 = vsel %vm100, %v98, 0
  %v105 = vsel %vm100, %v99, 0
  %v108 = vsel %vm100, %v54, 0
  %v111 = vsel %vm100, %v55, 0
  %v114 = vsel %vm100, %v56, 0
  %v117 = vsel %vm100, %v57, 0
  %v120 = vsel %vm100, %v58, 0
  %v123 = vsel %vm100, %v59, 0
  %v126 = vsel %vm100, %v60, 0
  %v129 = vsel %vm100, %v61, 0
  %131 = vmatprep.subr.bf16.mxu0 0
  %132 = vmatpush1.bf16.xpose.msra.mxu0 %v129
  %133 = vmatprep.subr.bf16.mxu0 0
  %134 = vmatpush1.bf16.xpose.msra.mxu0 %v126
  %135 = vmatprep.subr.bf16.mxu0 0
  %136 = vmatpush1.bf16.xpose.msra.mxu0 %v123
  %137 = vmatprep.subr.bf16.mxu0 0
  %138 = vmatpush1.bf16.xpose.msra.mxu0 %v120
  %139 = vmatprep.subr.bf16.mxu0 0
  %140 = vmatpush1.bf16.xpose.msra.mxu0 %v117
  %141 = vmatprep.subr.bf16.mxu0 0
  %142 = vmatpush1.bf16.xpose.msra.mxu0 %v114
  %143 = vmatprep.subr.bf16.mxu0 0
  %144 = vmatpush1.bf16.xpose.msra.mxu0 %v111
  %145 = vmatprep.subr.bf16.mxu0 0
  %146 = vmatpush1.bf16.xpose.msra.mxu0 %v108
  %147 = vmatprep.subr.bf16.mxu0 0
  %148 = vmatpush2.bf16.xpose.msra.mxu0 0
  %149 = vmatprep.subr.bf16.mxu0 0
  %150 = vmatpush2.bf16.xpose.msra.mxu0 0
  %151 = vmatprep.subr.bf16.mxu0 0
  %152 = vmatpush2.bf16.xpose.msra.mxu0 0
  %153 = vmatprep.subr.bf16.mxu0 0
  %154 = vmatpush2.bf16.xpose.msra.mxu0 0
  %155 = vmatprep.subr.bf16.mxu0 0
  %156 = vmatpush2.bf16.xpose.msra.mxu0 0
  %157 = vmatprep.subr.bf16.mxu0 0
  %158 = vmatpush2.bf16.xpose.msra.mxu0 0
  %159 = vmatprep.subr.bf16.mxu0 0
  %160 = vmatpush2.bf16.xpose.msra.mxu0 0
  %161 = vmatprep.subr.bf16.mxu0 0
  %162 = vmatpush2.bf16.xpose.msra.mxu0 0
  %163 = vmatprep.mubr.bf16.mxu0 0
  %164 = vmatmul.mubr.bf16.gmra.mxu0 %v102
  %v165 = vpop.f32.mrf.mxu0
  %v166 = vadd.f32 %v73, %v165
  %v167 = vpop.f32.mrf.mxu0
  %v168 = vpop.f32.mrf.mxu0
  %v169 = vadd.f32 %v78, %v168
  %v170 = vpop.f32.mrf.mxu0
  %171 = vmatprep.mubr.bf16.mxu0 0
  %172 = vmatmul.mubr.bf16.gmra.mxu0 %v105
  %v173 = vpop.f32.mrf.mxu0
  %v174 = vadd.f32 %v83, %v173
  %v175 = vpop.f32.mrf.mxu0
  %v176 = vpop.f32.mrf.mxu0
  %v177 = vadd.f32 %v88, %v176
  %v178 = vpop.f32.mrf.mxu0
  %179 = vdwg.mxu0
  %v180 = vpack.c.bf16 %v169, %v166
  %v181 = vpack.c.bf16 %v177, %v174
  %v182 = vmul.bf16 %v180, 1056980736
  %v183 = vmul.bf16 %v181, 1056980736
  %v184 = vmul.bf16 %v180, %v180
  %v185 = vmul.bf16 %v181, %v181
  %v186 = vmul.bf16 %v184, %v180
  %v187 = vmul.bf16 %v185, %v181
  %v188 = vmul.bf16 %v186, 1027030327
  %v189 = vmul.bf16 %v187, 1027030327
  %v190 = vadd.bf16 %v180, %v188
  %v191 = vadd.bf16 %v181, %v189
  %v192 = vmul.bf16 %v190, 1061961548
  %v193 = vmul.bf16 %v191, 1061961548
  %v194 = vtanh.bf16.pop %v192
  %v195 = vtanh.bf16.pop %v193
  %v196 = vadd.bf16 %v194, 1065369472
  %v197 = vadd.bf16 %v195, 1065369472
  %v198 = vmul.bf16 %v182, %v196
  %v199 = vmul.bf16 %v183, %v197
  %v200 = vld [vmem:[%s3] sm:$0xf]
  %v201 = vld [vmem:[%s3 + $0x4] sm:$0xf]
  %v202 = vld [vmem:[%s3 + $0x8] sm:$0xf]
  %v203 = vld [vmem:[%s3 + $0xc] sm:$0xf]
  %v204 = vld [vmem:[%s4] sm:$0xff]
  %v205 = vld [vmem:[%s4 + $0x8] sm:$0xff]
  %v206 = vld [vmem:[%s4 + $0x10] sm:$0xff]
  %v207 = vld [vmem:[%s4 + $0x18] sm:$0xff]
  %209 = vset.pattern.permute.xlu0 0
  %210 = vperm.xlu0 %209, %v204
  %v211 = vpop.permute.xlu0 %210
  %214 = vset.pattern.permute.xlu0 0
  %215 = vperm.xlu0 %214, %v205
  %v216 = vpop.permute.xlu0 %215
  %219 = vset.pattern.permute.xlu0 0
  %220 = vperm.xlu0 %219, %v206
  %v221 = vpop.permute.xlu0 %220
  %224 = vset.pattern.permute.xlu0 0
  %225 = vperm.xlu0 %224, %v207
  %v226 = vpop.permute.xlu0 %225
  %v232 = vunpack.c.l.b16 %v200
  %v233 = vunpack.c.l.b16 %v201
  %v234 = vunpack.c.l.b16 %v202
  %v235 = vunpack.c.l.b16 %v203
  %v236 = vpack.c.b16 %v233, %v232
  %v237 = vpack.c.b16 %v235, %v234
  %vm238 = vcmask 261120
  %v240 = vsel %vm238, %v236, 0
  %v243 = vsel %vm238, %v237, 0
  %245 = vmatprep.subr.bf16.mxu0 0
  %246 = vmatpush1.bf16.msra.mxu0 0
  %247 = vmatprep.subr.bf16.mxu0 0
  %248 = vmatpush1.bf16.msra.mxu0 0
  %249 = vmatprep.subr.bf16.mxu0 0
  %250 = vmatpush1.bf16.msra.mxu0 0
  %251 = vmatprep.subr.bf16.mxu0 0
  %252 = vmatpush1.bf16.msra.mxu0 0
  %253 = vmatprep.subr.bf16.mxu0 0
  %254 = vmatpush1.bf16.msra.mxu0 0
  %255 = vmatprep.subr.bf16.mxu0 0
  %256 = vmatpush1.bf16.msra.mxu0 0
  %257 = vmatprep.subr.bf16.mxu0 0
  %258 = vmatpush1.bf16.msra.mxu0 %v199
  %259 = vmatprep.subr.bf16.mxu0 0
  %260 = vmatpush1.bf16.msra.mxu0 %v198
  %261 = vmatprep.subr.bf16.mxu0 0
  %262 = vmatpush2.bf16.msra.mxu0 0
  %263 = vmatprep.subr.bf16.mxu0 0
  %264 = vmatpush2.bf16.msra.mxu0 0
  %265 = vmatprep.subr.bf16.mxu0 0
  %266 = vmatpush2.bf16.msra.mxu0 0
  %267 = vmatprep.subr.bf16.mxu0 0
  %268 = vmatpush2.bf16.msra.mxu0 0
  %269 = vmatprep.subr.bf16.mxu0 0
  %270 = vmatpush2.bf16.msra.mxu0 0
  %271 = vmatprep.subr.bf16.mxu0 0
  %272 = vmatpush2.bf16.msra.mxu0 0
  %273 = vmatprep.subr.bf16.mxu0 0
  %274 = vmatpush2.bf16.msra.mxu0 0
  %275 = vmatprep.subr.bf16.mxu0 0
  %276 = vmatpush2.bf16.msra.mxu0 0
  %277 = vmatprep.mubr.bf16.mxu0 0
  %278 = vmatmul.mubr.bf16.gmra.mxu0 %v240
  %v279 = vpop.f32.mrf.mxu0
  %v280 = vadd.f32 %v211, %v279
  %v281 = vpop.f32.mrf.mxu0
  %v282 = vpop.f32.mrf.mxu0
  %v283 = vadd.f32 %v216, %v282
  %v284 = vpop.f32.mrf.mxu0
  %285 = vmatprep.mubr.bf16.mxu0 0
  %286 = vmatmul.mubr.bf16.gmra.mxu0 %v243
  %v287 = vpop.f32.mrf.mxu0
  %v288 = vadd.f32 %v221, %v287
  %v289 = vpop.f32.mrf.mxu0
  %v290 = vpop.f32.mrf.mxu0
  %v291 = vadd.f32 %v226, %v290
  %v292 = vpop.f32.mrf.mxu0
  %293 = vdwg.mxu0
  %v294 = vpack.c.bf16 %v283, %v280
  %v295 = vpack.c.bf16 %v291, %v288
  %v296 = vmul.bf16 %v294, 1056980736
  %v297 = vmul.bf16 %v295, 1056980736
  %v298 = vmul.bf16 %v294, %v294
  %v299 = vmul.bf16 %v295, %v295
  %v300 = vmul.bf16 %v298, %v294
  %v301 = vmul.bf16 %v299, %v295
  %v302 = vmul.bf16 %v300, 1027030327
  %v303 = vmul.bf16 %v301, 1027030327
  %v304 = vadd.bf16 %v294, %v302
  %v305 = vadd.bf16 %v295, %v303
  %v306 = vmul.bf16 %v304, 1061961548
  %v307 = vmul.bf16 %v305, 1061961548
  %v308 = vtanh.bf16.pop %v306
  %v309 = vtanh.bf16.pop %v307
  %v310 = vadd.bf16 %v308, 1065369472
  %v311 = vadd.bf16 %v309, 1065369472
  %v312 = vmul.bf16 %v296, %v310
  %v313 = vmul.bf16 %v297, %v311
  %v314 = vadd.bf16 %v312, %v198
  %v315 = vadd.bf16 %v313, %v199
  %v316 = vld [vmem:[%s5] sm:$0xf]
  %v317 = vld [vmem:[%s5 + $0x4] sm:$0xf]
  %v318 = vld [vmem:[%s5 + $0x8] sm:$0xf]
  %v319 = vld [vmem:[%s5 + $0xc] sm:$0xf]
  %v320 = vld [vmem:[%s6] sm:$0xff]
  %v321 = vld [vmem:[%s6 + $0x8] sm:$0xff]
  %v322 = vld [vmem:[%s6 + $0x10] sm:$0xff]
  %v323 = vld [vmem:[%s6 + $0x18] sm:$0xff]
  %325 = vset.pattern.permute.xlu0 0
  %326 = vperm.xlu0 %325, %v320
  %v327 = vpop.permute.xlu0 %326
  %330 = vset.pattern.permute.xlu0 0
  %331 = vperm.xlu0 %330, %v321
  %v332 = vpop.permute.xlu0 %331
  %335 = vset.pattern.permute.xlu0 0
  %336 = vperm.xlu0 %335, %v322
  %v337 = vpop.permute.xlu0 %336
  %340 = vset.pattern.permute.xlu0 0
  %341 = vperm.xlu0 %340, %v323
  %v342 = vpop.permute.xlu0 %341
  %v348 = vunpack.c.l.b16 %v316
  %v349 = vunpack.c.l.b16 %v317
  %v350 = vunpack.c.l.b16 %v318
  %v351 = vunpack.c.l.b16 %v319
  %v352 = vpack.c.b16 %v349, %v348
  %v353 = vpack.c.b16 %v351, %v350
  %v355 = vsel %vm238, %v352, 0
  %v358 = vsel %vm238, %v353, 0
  %360 = vmatprep.subr.bf16.mxu0 0
  %361 = vmatpush1.bf16.msra.mxu0 0
  %362 = vmatprep.subr.bf16.mxu0 0
  %363 = vmatpush1.bf16.msra.mxu0 0
  %364 = vmatprep.subr.bf16.mxu0 0
  %365 = vmatpush1.bf16.msra.mxu0 0
  %366 = vmatprep.subr.bf16.mxu0 0
  %367 = vmatpush1.bf16.msra.mxu0 0
  %368 = vmatprep.subr.bf16.mxu0 0
  %369 = vmatpush1.bf16.msra.mxu0 0
  %370 = vmatprep.subr.bf16.mxu0 0
  %371 = vmatpush1.bf16.msra.mxu0 0
  %372 = vmatprep.subr.bf16.mxu0 0
  %373 = vmatpush1.bf16.msra.mxu0 %v315
  %374 = vmatprep.subr.bf16.mxu0 0
  %375 = vmatpush1.bf16.msra.mxu0 %v314
  %376 = vmatprep.subr.bf16.mxu0 0
  %377 = vmatpush2.bf16.msra.mxu0 0
  %378 = vmatprep.subr.bf16.mxu0 0
  %379 = vmatpush2.bf16.msra.mxu0 0
  %380 = vmatprep.subr.bf16.mxu0 0
  %381 = vmatpush2.bf16.msra.mxu0 0
  %382 = vmatprep.subr.bf16.mxu0 0
  %383 = vmatpush2.bf16.msra.mxu0 0
  %384 = vmatprep.subr.bf16.mxu0 0
  %385 = vmatpush2.bf16.msra.mxu0 0
  %386 = vmatprep.subr.bf16.mxu0 0
  %387 = vmatpush2.bf16.msra.mxu0 0
  %388 = vmatprep.subr.bf16.mxu0 0
  %389 = vmatpush2.bf16.msra.mxu0 0
  %390 = vmatprep.subr.bf16.mxu0 0
  %391 = vmatpush2.bf16.msra.mxu0 0
  %392 = vmatprep.mubr.bf16.mxu0 0
  %393 = vmatmul.mubr.bf16.gmra.mxu0 %v355
  %v394 = vpop.f32.mrf.mxu0
  %v395 = vadd.f32 %v327, %v394
  %v396 = vpop.f32.mrf.mxu0
  %v397 = vpop.f32.mrf.mxu0
  %v398 = vadd.f32 %v332, %v397
  %v399 = vpop.f32.mrf.mxu0
  %400 = vmatprep.mubr.bf16.mxu0 0
  %401 = vmatmul.mubr.bf16.gmra.mxu0 %v358
  %v402 = vpop.f32.mrf.mxu0
  %v403 = vadd.f32 %v337, %v402
  %v404 = vpop.f32.mrf.mxu0
  %v405 = vpop.f32.mrf.mxu0
  %v406 = vadd.f32 %v342, %v405
  %v407 = vpop.f32.mrf.mxu0
  %408 = vdwg.mxu0
  %v409 = vpack.c.bf16 %v398, %v395
  %v410 = vpack.c.bf16 %v406, %v403
  %v411 = vmul.bf16 %v409, 1056980736
  %v412 = vmul.bf16 %v410, 1056980736
  %v413 = vmul.bf16 %v409, %v409
  %v414 = vmul.bf16 %v410, %v410
  %v415 = vmul.bf16 %v413, %v409
  %v416 = vmul.bf16 %v414, %v410
  %v417 = vmul.bf16 %v415, 1027030327
  %v418 = vmul.bf16 %v416, 1027030327
  %v419 = vadd.bf16 %v409, %v417
  %v420 = vadd.bf16 %v410, %v418
  %v421 = vmul.bf16 %v419, 1061961548
  %v422 = vmul.bf16 %v420, 1061961548
  %v423 = vtanh.bf16.pop %v421
  %v424 = vtanh.bf16.pop %v422
  %v425 = vadd.bf16 %v423, 1065369472
  %v426 = vadd.bf16 %v424, 1065369472
  %v427 = vmul.bf16 %v411, %v425
  %v428 = vmul.bf16 %v412, %v426
  %v429 = vadd.bf16 %v427, %v314
  %v430 = vadd.bf16 %v428, %v315
  %v431 = vld [vmem:[%s7] sm:$0x1]
  %s432 = sld [smem:[#allocation2]]
  %v433 = vstv %s432
  %v435 = vsel %vm238, %v431, 0
  %437 = vmatprep.subr.bf16.mxu0 0
  %438 = vmatpush1.bf16.msra.mxu0 0
  %439 = vmatprep.subr.bf16.mxu0 0
  %440 = vmatpush1.bf16.msra.mxu0 0
  %441 = vmatprep.subr.bf16.mxu0 0
  %442 = vmatpush1.bf16.msra.mxu0 0
  %443 = vmatprep.subr.bf16.mxu0 0
  %444 = vmatpush1.bf16.msra.mxu0 0
  %445 = vmatprep.subr.bf16.mxu0 0
  %446 = vmatpush1.bf16.msra.mxu0 0
  %447 = vmatprep.subr.bf16.mxu0 0
  %448 = vmatpush1.bf16.msra.mxu0 0
  %449 = vmatprep.subr.bf16.mxu0 0
  %450 = vmatpush1.bf16.msra.mxu0 %v430
  %451 = vmatprep.subr.bf16.mxu0 0
  %452 = vmatpush1.bf16.msra.mxu0 %v429
  %453 = vmatprep.subr.bf16.mxu0 0
  %454 = vmatpush2.bf16.msra.mxu0 0
  %455 = vmatprep.subr.bf16.mxu0 0
  %456 = vmatpush2.bf16.msra.mxu0 0
  %457 = vmatprep.subr.bf16.mxu0 0
  %458 = vmatpush2.bf16.msra.mxu0 0
  %459 = vmatprep.subr.bf16.mxu0 0
  %460 = vmatpush2.bf16.msra.mxu0 0
  %461 = vmatprep.subr.bf16.mxu0 0
  %462 = vmatpush2.bf16.msra.mxu0 0
  %463 = vmatprep.subr.bf16.mxu0 0
  %464 = vmatpush2.bf16.msra.mxu0 0
  %465 = vmatprep.subr.bf16.mxu0 0
  %466 = vmatpush2.bf16.msra.mxu0 0
  %467 = vmatprep.subr.bf16.mxu0 0
  %468 = vmatpush2.bf16.msra.mxu0 0
  %469 = vmatprep.mubr.bf16.mxu0 0
  %470 = vmatmul.mubr.bf16.gmra.mxu0 %v435
  %v471 = vpop.f32.mrf.mxu0
  %v472 = vadd.f32 %v433, %v471
  %v473 = vpop.f32.mrf.mxu0
  %v474 = vpop.f32.mrf.mxu0
  %v475 = vpop.f32.mrf.mxu0
  %476 = vdwg.mxu0
  %v477 = vxor.u32 %v472, 2147483648
  %v478 = vmul.f32 %v477, 1.442695
  %v479 = vpow.pop %v478
  %v480 = vadd.f32 %v479, 1.0
  %v481 = vrcp.pop %v480
  %v482 = vmul.f32 1.0, %v481
  %483 = vst [vmem:[%s9] sm:$0x1] %v482
  // Predicated region
  $region38: #{simple_nn_forward.1} parent=0 // pred_check
    _
  $region39: #{simple_nn_forward.1} parent=0 // pred_check_branch
    %485 = sbr.rel (0) target = $region41
  $region40: #{simple_nn_forward.1} parent=0 // pred_region
    _
  $region41: #{simple_nn_forward.1} parent=0 // pred_fallthru
    _
  // Predicated region
  $region42: #{simple_nn_forward.1} parent=0 // pred_check
    _
  $region43: #{simple_nn_forward.1} parent=0 // pred_check_branch
    %487 = sbr.rel (0) target = $region45
  $region44: #{simple_nn_forward.1} parent=0 // pred_region
    _
  $region45: #{simple_nn_forward.1} parent=0 // pred_fallthru
    _

</llo_original>
